<compile_context>
chip_gen: v7x
topology: tpu7x:2x2x1
jax: 0.10.0
libtpu: 0.0.40
codegen_flags: <defaults>
</compile_context>

<pallas_src>
import functools

import jax
import jax.numpy as jnp
from jax import lax
from jax.experimental import pallas as pl
from jax.experimental.pallas import tpu as pltpu


# ------------------------------ fused kernel ----------------------------------
def _embeddings_kernel(ts, eps,
                       ids_ref, tids_ref,             # scalar prefetch (SMEM)
                       wte_hbm, tte_hbm,              # HBM embedding tables (pl.ANY)
                       pos_ref, gamma_ref, beta_ref,  # auto-DMA'd VMEM tiles
                       o_ref,                         # output tile (ts, H)
                       wbuf, tbuf, wsem, tsem):       # VMEM scratch + DMA sems
    b = pl.program_id(0)
    s = pl.program_id(1)
    s0 = s * ts

    # Issue one row-gather DMA per token for word- and token-type embeddings.
    @pl.loop(0, ts)
    def _start(r):
        wid = ids_ref[b, s0 + r]
        tid = tids_ref[b, s0 + r]
        pltpu.make_async_copy(wte_hbm.at[wid], wbuf.at[r], wsem.at[r]).start()
        pltpu.make_async_copy(tte_hbm.at[tid], tbuf.at[r], tsem.at[r]).start()

    @pl.loop(0, ts)
    def _wait(r):
        pltpu.make_async_copy(wte_hbm.at[0], wbuf.at[r], wsem.at[r]).wait()
        pltpu.make_async_copy(tte_hbm.at[0], tbuf.at[r], tsem.at[r]).wait()

    # Sum the three embeddings (f32 math) and apply BertLayerNorm.
    e = (wbuf[...].astype(jnp.float32)
         + tbuf[...].astype(jnp.float32)
         + pos_ref[...].astype(jnp.float32))                    # (ts, H)

    u = jnp.mean(e, axis=-1, keepdims=True)
    d = e - u
    var = jnp.mean(d * d, axis=-1, keepdims=True)
    hn = d * lax.rsqrt(var + eps)                               # EUP rsqrt, no divide
    out = gamma_ref[...] * hn + beta_ref[...]
    o_ref[...] = out.astype(o_ref.dtype)
    # TODO(synk): nn.Dropout omitted (eval/inference mode -> identity).


# ------------------------------ wrapper ----------------------------------------
def bert_embeddings(input_ids, word_emb, pos_emb, type_emb, gamma, beta,
                    token_type_ids=None, *, ts=None, eps=1e-12):
    """input_ids: [B, S] int; word_emb: [V, H]; pos_emb: [P, H]; type_emb: [T, H]."""
    B, S = input_ids.shape
    V, H = word_emb.shape
    P = pos_emb.shape[0]
    assert S <= P, "sequence longer than max_position_embeddings"
    if token_type_ids is None:
        token_type_ids = jnp.zeros_like(input_ids)

    if ts is None:  # largest token tile (multiple of 8) that evenly divides S
        ts = next((c for c in (256, 128, 64, 32, 16, 8) if S % c == 0), S)
    assert S % ts == 0, "token tile must divide S (pad S for ragged sequences)"

    gamma2 = gamma.reshape(1, H)
    beta2 = beta.reshape(1, H)

    kernel = functools.partial(_embeddings_kernel, ts, eps)

    out = pl.pallas_call(
        kernel,
        out_shape=jax.ShapeDtypeStruct((B, S, H), word_emb.dtype),
        grid_spec=pltpu.PrefetchScalarGridSpec(
            num_scalar_prefetch=2,
            grid=(B, S // ts),
            in_specs=[
                pl.BlockSpec(memory_space=pl.ANY),                       # word table (HBM)
                pl.BlockSpec(memory_space=pl.ANY),                       # type table (HBM)
                pl.BlockSpec((ts, H), lambda b, s, ids, tids: (s, 0)),   # position rows
                pl.BlockSpec((1, H), lambda b, s, ids, tids: (0, 0)),    # gamma
                pl.BlockSpec((1, H), lambda b, s, ids, tids: (0, 0)),    # beta
            ],
            out_specs=pl.BlockSpec((None, ts, H),
                                   lambda b, s, ids, tids: (b, s, 0)),
            scratch_shapes=[
                pltpu.VMEM((ts, H), word_emb.dtype),
                pltpu.VMEM((ts, H), type_emb.dtype),
                pltpu.SemaphoreType.DMA((ts,)),
                pltpu.SemaphoreType.DMA((ts,)),
            ],
        ),
        compiler_params=pltpu.CompilerParams(
            dimension_semantics=("parallel", "parallel")),
    )(input_ids.astype(jnp.int32), token_type_ids.astype(jnp.int32),
      word_emb, type_emb, pos_emb, gamma2, beta2)

    return out


# ------------------------------ reference --------------------------------------
def reference(input_ids, token_type_ids, word_emb, pos_emb, type_emb, gamma, beta,
              eps=1e-12):
    B, S = input_ids.shape
    e = (word_emb[input_ids]
         + pos_emb[jnp.arange(S)][None, :, :]
         + type_emb[token_type_ids])
    u = jnp.mean(e, axis=-1, keepdims=True)
    var = jnp.mean((e - u) ** 2, axis=-1, keepdims=True)
    return gamma * (e - u) / jnp.sqrt(var + eps) + beta


if __name__ == "__main__":
    # small config: batch=2, seq=8, hidden=32, vocab=128, max_pos=16, type_vocab=2
    B, S, H = 2, 8, 32
    V, P, T = 128, 16, 2

    key = jax.random.PRNGKey(0)
    k_ids, k_tids, k_w, k_p, k_t, k_g, k_b = jax.random.split(key, 7)

    input_ids = jax.random.randint(k_ids, (B, S), 0, V, dtype=jnp.int32)
    token_type_ids = jax.random.randint(k_tids, (B, S), 0, T, dtype=jnp.int32)

    word_emb = jax.random.normal(k_w, (V, H), dtype=jnp.float32) * 0.02
    pos_emb = jax.random.normal(k_p, (P, H), dtype=jnp.float32) * 0.02
    type_emb = jax.random.normal(k_t, (T, H), dtype=jnp.float32) * 0.02
    gamma = 1.0 + 0.1 * jax.random.normal(k_g, (H,), dtype=jnp.float32)
    beta = 0.1 * jax.random.normal(k_b, (H,), dtype=jnp.float32)

    out = bert_embeddings(input_ids, word_emb, pos_emb, type_emb, gamma, beta,
                          token_type_ids=token_type_ids)
    out = jax.block_until_ready(out)

    ref = reference(input_ids, token_type_ids, word_emb, pos_emb, type_emb,
                    gamma, beta)
    assert out.shape == (B, S, H)
    assert jnp.allclose(out, ref, atol=1e-5, rtol=1e-5), "mismatch vs reference"

    print("KERNEL_OK")
</pallas_src>

<mosaic_0001>
module attributes {stable_mosaic.version = 11 : i64} {
  func.func @_embeddings_kernel(%arg0: i32, %arg1: i32, %arg2: memref<2x8xi32, #tpu.memory_space<smem>>, %arg3: memref<2x8xi32, #tpu.memory_space<smem>>, %arg4: memref<128x32xf32, #tpu.memory_space<any>>, %arg5: memref<2x32xf32, #tpu.memory_space<any>>, %arg6: memref<8x32xf32, #tpu.memory_space<vmem>>, %arg7: memref<1x32xf32, #tpu.memory_space<vmem>>, %arg8: memref<1x32xf32, #tpu.memory_space<vmem>>, %arg9: memref<1x8x32xf32, #tpu.memory_space<vmem>>, %arg10: memref<8x32xf32, #tpu.memory_space<vmem>>, %arg11: memref<8x32xf32, #tpu.memory_space<vmem>>, %arg12: memref<8x!tpu.dma_semaphore, #tpu.memory_space<semaphore_mem>>, %arg13: memref<8x!tpu.dma_semaphore, #tpu.memory_space<semaphore_mem>>) attributes {dimension_semantics = [#tpu.dimension_semantics<parallel>, #tpu.dimension_semantics<parallel>], iteration_bounds = array<i64: 2, 1>, scalar_prefetch = 2 : i64, scratch_operands = 4 : i64, tpu.core_type = #tpu.core_type<tc>, window_params = [{}, {}, {transform_indices = @transform_2, window_bounds = array<i64: 8, 32>}, {pipeline_mode = #tpu.pipeline_mode<synchronous>, transform_indices = @transform_3, window_bounds = array<i64: 1, 32>}, {pipeline_mode = #tpu.pipeline_mode<synchronous>, transform_indices = @transform_4, window_bounds = array<i64: 1, 32>}, {transform_indices = @transform_5, window_bounds = array<i64: 1, 8, 32>}]} {
    %c8_i32 = arith.constant 8 : i32
    %0 = arith.muli %arg1, %c8_i32 : i32
    %c0_i32 = arith.constant 0 : i32
    %c8_i32_0 = arith.constant 8 : i32
    %1 = arith.addi %c0_i32, %c8_i32_0 : i32
    %c1_i32 = arith.constant 1 : i32
    scf.for %arg14 = %c0_i32 to %1 step %c1_i32  : i32 {
      %c1_i32_22 = arith.constant 1 : i32
      %33 = arith.muli %arg14, %c1_i32_22 : i32
      %c0_i32_23 = arith.constant 0 : i32
      %34 = arith.addi %c0_i32_23, %33 : i32
      %35 = arith.addi %0, %34 : i32
      %36 = arith.index_cast %arg0 : i32 to index
      %37 = arith.index_cast %35 : i32 to index
      %38 = memref.load %arg2[%36, %37] : memref<2x8xi32, #tpu.memory_space<smem>>
      %39 = arith.addi %0, %34 : i32
      %40 = arith.index_cast %arg0 : i32 to index
      %41 = arith.index_cast %39 : i32 to index
      %42 = memref.load %arg3[%40, %41] : memref<2x8xi32, #tpu.memory_space<smem>>
      %c0_i32_24 = arith.constant 0 : i32
      %43 = tpu.memref_slice %arg4[%38, %c0_i32_24] : memref<128x32xf32, #tpu.memory_space<any>> -> memref<1x32xf32, #tpu.memory_space<any>>
      %44 = tpu.memref_squeeze %43 : memref<1x32xf32, #tpu.memory_space<any>> -> memref<32xf32, #tpu.memory_space<any>>
      %c0_i32_25 = arith.constant 0 : i32
      %45 = tpu.memref_slice %arg10[%34, %c0_i32_25] : memref<8x32xf32, #tpu.memory_space<vmem>> -> memref<1x32xf32, #tpu.memory_space<vmem>>
      %46 = tpu.memref_squeeze %45 : memref<1x32xf32, #tpu.memory_space<vmem>> -> memref<32xf32, #tpu.memory_space<vmem>>
      %47 = tpu.memref_slice %arg12[%34] : memref<8x!tpu.dma_semaphore, #tpu.memory_space<semaphore_mem>> -> memref<1x!tpu.dma_semaphore, #tpu.memory_space<semaphore_mem>>
      %48 = tpu.memref_squeeze %47 : memref<1x!tpu.dma_semaphore, #tpu.memory_space<semaphore_mem>> -> memref<!tpu.dma_semaphore, #tpu.memory_space<semaphore_mem>>
      tpu.enqueue_dma source(%44 : memref<32xf32, #tpu.memory_space<any>>) target(%46 : memref<32xf32, #tpu.memory_space<vmem>>) target_semaphore(%48 : memref<!tpu.dma_semaphore, #tpu.memory_space<semaphore_mem>>)
      %c0_i32_26 = arith.constant 0 : i32
      %49 = tpu.memref_slice %arg5[%42, %c0_i32_26] : memref<2x32xf32, #tpu.memory_space<any>> -> memref<1x32xf32, #tpu.memory_space<any>>
      %50 = tpu.memref_squeeze %49 : memref<1x32xf32, #tpu.memory_space<any>> -> memref<32xf32, #tpu.memory_space<any>>
      %c0_i32_27 = arith.constant 0 : i32
      %51 = tpu.memref_slice %arg11[%34, %c0_i32_27] : memref<8x32xf32, #tpu.memory_space<vmem>> -> memref<1x32xf32, #tpu.memory_space<vmem>>
      %52 = tpu.memref_squeeze %51 : memref<1x32xf32, #tpu.memory_space<vmem>> -> memref<32xf32, #tpu.memory_space<vmem>>
      %53 = tpu.memref_slice %arg13[%34] : memref<8x!tpu.dma_semaphore, #tpu.memory_space<semaphore_mem>> -> memref<1x!tpu.dma_semaphore, #tpu.memory_space<semaphore_mem>>
      %54 = tpu.memref_squeeze %53 : memref<1x!tpu.dma_semaphore, #tpu.memory_space<semaphore_mem>> -> memref<!tpu.dma_semaphore, #tpu.memory_space<semaphore_mem>>
      tpu.enqueue_dma source(%50 : memref<32xf32, #tpu.memory_space<any>>) target(%52 : memref<32xf32, #tpu.memory_space<vmem>>) target_semaphore(%54 : memref<!tpu.dma_semaphore, #tpu.memory_space<semaphore_mem>>)
    }
    %c8_i32_1 = arith.constant 8 : i32
    %c0_i32_2 = arith.constant 0 : i32
    %c8_i32_3 = arith.constant 8 : i32
    %2 = arith.addi %c0_i32_2, %c8_i32_3 : i32
    %c1_i32_4 = arith.constant 1 : i32
    scf.for %arg14 = %c0_i32_2 to %2 step %c1_i32_4  : i32 {
      %c1_i32_22 = arith.constant 1 : i32
      %33 = arith.muli %arg14, %c1_i32_22 : i32
      %c0_i32_23 = arith.constant 0 : i32
      %34 = arith.addi %c0_i32_23, %33 : i32
      %c0_i32_24 = arith.constant 0 : i32
      %c0_i32_25 = arith.constant 0 : i32
      %35 = tpu.memref_slice %arg4[%c0_i32_24, %c0_i32_25] : memref<128x32xf32, #tpu.memory_space<any>> -> memref<1x32xf32, #tpu.memory_space<any>>
      %36 = tpu.memref_squeeze %35 : memref<1x32xf32, #tpu.memory_space<any>> -> memref<32xf32, #tpu.memory_space<any>>
      %c0_i32_26 = arith.constant 0 : i32
      %37 = tpu.memref_slice %arg10[%34, %c0_i32_26] : memref<8x32xf32, #tpu.memory_space<vmem>> -> memref<1x32xf32, #tpu.memory_space<vmem>>
      %38 = tpu.memref_squeeze %37 : memref<1x32xf32, #tpu.memory_space<vmem>> -> memref<32xf32, #tpu.memory_space<vmem>>
      %39 = tpu.memref_slice %arg12[%34] : memref<8x!tpu.dma_semaphore, #tpu.memory_space<semaphore_mem>> -> memref<1x!tpu.dma_semaphore, #tpu.memory_space<semaphore_mem>>
      %40 = tpu.memref_squeeze %39 : memref<1x!tpu.dma_semaphore, #tpu.memory_space<semaphore_mem>> -> memref<!tpu.dma_semaphore, #tpu.memory_space<semaphore_mem>>
      tpu.wait_dma2 semaphore(%40 : memref<!tpu.dma_semaphore, #tpu.memory_space<semaphore_mem>>) src(%36 : memref<32xf32, #tpu.memory_space<any>>) dst(%38 : memref<32xf32, #tpu.memory_space<vmem>>)
      %c0_i32_27 = arith.constant 0 : i32
      %c0_i32_28 = arith.constant 0 : i32
      %41 = tpu.memref_slice %arg5[%c0_i32_27, %c0_i32_28] : memref<2x32xf32, #tpu.memory_space<any>> -> memref<1x32xf32, #tpu.memory_space<any>>
      %42 = tpu.memref_squeeze %41 : memref<1x32xf32, #tpu.memory_space<any>> -> memref<32xf32, #tpu.memory_space<any>>
      %c0_i32_29 = arith.constant 0 : i32
      %43 = tpu.memref_slice %arg11[%34, %c0_i32_29] : memref<8x32xf32, #tpu.memory_space<vmem>> -> memref<1x32xf32, #tpu.memory_space<vmem>>
      %44 = tpu.memref_squeeze %43 : memref<1x32xf32, #tpu.memory_space<vmem>> -> memref<32xf32, #tpu.memory_space<vmem>>
      %45 = tpu.memref_slice %arg13[%34] : memref<8x!tpu.dma_semaphore, #tpu.memory_space<semaphore_mem>> -> memref<1x!tpu.dma_semaphore, #tpu.memory_space<semaphore_mem>>
      %46 = tpu.memref_squeeze %45 : memref<1x!tpu.dma_semaphore, #tpu.memory_space<semaphore_mem>> -> memref<!tpu.dma_semaphore, #tpu.memory_space<semaphore_mem>>
      tpu.wait_dma2 semaphore(%46 : memref<!tpu.dma_semaphore, #tpu.memory_space<semaphore_mem>>) src(%42 : memref<32xf32, #tpu.memory_space<any>>) dst(%44 : memref<32xf32, #tpu.memory_space<vmem>>)
    }
    %c8_i32_5 = arith.constant 8 : i32
    %c0 = arith.constant 0 : index
    %c0_6 = arith.constant 0 : index
    %3 = vector.load %arg10[%c0, %c0_6] : memref<8x32xf32, #tpu.memory_space<vmem>>, vector<8x32xf32>
    %c0_7 = arith.constant 0 : index
    %c0_8 = arith.constant 0 : index
    %4 = vector.load %arg11[%c0_7, %c0_8] : memref<8x32xf32, #tpu.memory_space<vmem>>, vector<8x32xf32>
    %5 = arith.addf %3, %4 : vector<8x32xf32>
    %c0_9 = arith.constant 0 : index
    %c0_10 = arith.constant 0 : index
    %6 = vector.load %arg6[%c0_9, %c0_10] : memref<8x32xf32, #tpu.memory_space<vmem>>, vector<8x32xf32>
    %7 = arith.addf %5, %6 : vector<8x32xf32>
    %cst = arith.constant dense<0.000000e+00> : vector<8xf32>
    %8 = vector.multi_reduction <add>, %7, %cst [1] : vector<8x32xf32> to vector<8xf32>
    %9 = vector.shape_cast %8 : vector<8xf32> to vector<8x1xf32>
    %cst_11 = arith.constant 3.200000e+01 : f32
    %10 = vector.broadcast %cst_11 : f32 to vector<8x1xf32>
    %11 = arith.divf %9, %10 : vector<8x1xf32>
    %12 = vector.broadcast %11 : vector<8x1xf32> to vector<8x32xf32>
    %13 = arith.subf %7, %12 : vector<8x32xf32>
    %14 = arith.mulf %13, %13 : vector<8x32xf32>
    %cst_12 = arith.constant dense<0.000000e+00> : vector<8xf32>
    %15 = vector.multi_reduction <add>, %14, %cst_12 [1] : vector<8x32xf32> to vector<8xf32>
    %16 = vector.shape_cast %15 : vector<8xf32> to vector<8x1xf32>
    %cst_13 = arith.constant 3.200000e+01 : f32
    %17 = vector.broadcast %cst_13 : f32 to vector<8x1xf32>
    %18 = arith.divf %16, %17 : vector<8x1xf32>
    %cst_14 = arith.constant 9.99999996E-13 : f32
    %19 = vector.broadcast %cst_14 : f32 to vector<8x1xf32>
    %20 = arith.addf %18, %19 : vector<8x1xf32>
    %21 = math.rsqrt %20 : vector<8x1xf32>
    %22 = vector.broadcast %21 : vector<8x1xf32> to vector<8x32xf32>
    %23 = arith.mulf %13, %22 : vector<8x32xf32>
    %c0_15 = arith.constant 0 : index
    %c0_16 = arith.constant 0 : index
    %24 = vector.load %arg7[%c0_15, %c0_16] : memref<1x32xf32, #tpu.memory_space<vmem>>, vector<1x32xf32>
    %25 = vector.broadcast %24 : vector<1x32xf32> to vector<8x32xf32>
    %26 = arith.mulf %25, %23 : vector<8x32xf32>
    %c0_17 = arith.constant 0 : index
    %c0_18 = arith.constant 0 : index
    %27 = vector.load %arg8[%c0_17, %c0_18] : memref<1x32xf32, #tpu.memory_space<vmem>>, vector<1x32xf32>
    %28 = vector.broadcast %27 : vector<1x32xf32> to vector<8x32xf32>
    %29 = arith.addf %26, %28 : vector<8x32xf32>
    %c0_19 = arith.constant 0 : index
    %c0_20 = arith.constant 0 : index
    %c0_21 = arith.constant 0 : index
    %30 = vector.load %arg9[%c0_19, %c0_20, %c0_21] : memref<1x8x32xf32, #tpu.memory_space<vmem>>, vector<1x8x32xf32>
    %31 = vector.shape_cast %30 : vector<1x8x32xf32> to vector<8x32xf32>
    %32 = vector.shape_cast %29 : vector<8x32xf32> to vector<1x8x32xf32>
    tpu.vector_store %arg9[%c0_19, %c0_20, %c0_21], %32 {strides = array<i32>} : memref<1x8x32xf32, #tpu.memory_space<vmem>>, vector<1x8x32xf32>,
    return
  }
  func.func @transform_2(%arg0: i32, %arg1: i32, %arg2: memref<2x8xi32, #tpu.memory_space<smem>>, %arg3: memref<2x8xi32, #tpu.memory_space<smem>>) -> (i32, i32) {
    %c0_i32 = arith.constant 0 : i32
    %c0_i32_0 = arith.constant 0 : i32
    return %arg1, %c0_i32 : i32, i32
  }
  func.func @transform_3(%arg0: i32, %arg1: i32, %arg2: memref<2x8xi32, #tpu.memory_space<smem>>, %arg3: memref<2x8xi32, #tpu.memory_space<smem>>) -> (i32, i32) {
    %c0_i32 = arith.constant 0 : i32
    %c0_i32_0 = arith.constant 0 : i32
    %c0_i32_1 = arith.constant 0 : i32
    return %c0_i32, %c0_i32_0 : i32, i32
  }
  func.func @transform_4(%arg0: i32, %arg1: i32, %arg2: memref<2x8xi32, #tpu.memory_space<smem>>, %arg3: memref<2x8xi32, #tpu.memory_space<smem>>) -> (i32, i32) {
    %c0_i32 = arith.constant 0 : i32
    %c0_i32_0 = arith.constant 0 : i32
    %c0_i32_1 = arith.constant 0 : i32
    return %c0_i32, %c0_i32_0 : i32, i32
  }
  func.func @transform_5(%arg0: i32, %arg1: i32, %arg2: memref<2x8xi32, #tpu.memory_space<smem>>, %arg3: memref<2x8xi32, #tpu.memory_space<smem>>) -> (i32, i32, i32) {
    %c0_i32 = arith.constant 0 : i32
    %c0_i32_0 = arith.constant 0 : i32
    return %arg0, %arg1, %c0_i32 : i32, i32, i32
  }
}

</mosaic_0001>

<llo_original>
// kernel: tpu_custom_call.1
$region0: #{tpu_custom_call.1}
  #allocation0 [shape = 'u32[]', space=smem, size = 0x4, offset = 0x4, fixed_abs, tag = 'smem constant byte address 0x4 - core index']
  #allocation1 [shape = 'u32[144,128]{1,0:T(1,128)}', space=vmem, size = 0x12000, scoped, tag = 'internal scratch']
  #allocation2 [shape = 'f32[8,32]{1,0:T(8,128)}', space=vmem, size = 0x1000, scoped, tag = 'scratch operand']
  #allocation3 [shape = 'f32[8,32]{1,0:T(8,128)}', space=vmem, size = 0x1000, scoped, tag = 'scratch operand']
  #allocation4 [shape = 's32[8]{0}', space=sflag, size = 0x20, scoped, tag = 'scratch operand']
  #allocation5 [shape = 's32[8]{0}', space=sflag, size = 0x20, scoped, tag = 'scratch operand']
  #allocation6 [shape = 's32[1]{0}', space=sflag, size = 0x4, scoped, tag = 'scoped memory for tpu_custom_call.1']
  #allocation7 [shape = 'u8[1024]{0}', space=smem, size = 0x400, scoped, tag = 'prefetched SMEM operand 0']
  #allocation8 [shape = 'u8[1024]{0}', space=smem, size = 0x400, scoped, tag = 'prefetched SMEM operand 1']
  #allocation11 [shape = 's32[]', space=sflag, size = 0x4, offset = 0, fixed_abs, tag = 'sflag constant byte address 0x0 - dummy sync flag']
  #allocation12 [shape = 's32[]', space=sflag, size = 0x4, offset = 0, fixed_abs, tag = 'sflag constant byte address 0x0 - dummy sync flag']
  %s0 = inlined_call_operand.vmem [shape: s32[2,8], index: 0, kind: input, shape index: {}]
  %s1 = inlined_call_operand.vmem [shape: s32[2,8], index: 1, kind: input, shape index: {}]
  %s2 = inlined_call_operand.vmem [shape: f32[128,32], index: 2, kind: input, shape index: {}]
  %s3 = inlined_call_operand.vmem [shape: f32[2,32], index: 3, kind: input, shape index: {}]
  %s4 = inlined_call_operand.vmem [shape: f32[16,32], index: 4, kind: input, shape index: {}]
  %s5 = inlined_call_operand.vmem [shape: f32[1,32], index: 5, kind: input, shape index: {}]
  %s6 = inlined_call_operand.vmem [shape: f32[1,32], index: 6, kind: input, shape index: {}]
  %s7 = inlined_call_operand.hbm [shape: f32[2,8,32], index: 7, kind: output, shape index: {}]
  %s8 = sld [smem:[#allocation0]]
  $region119: #{tpu_custom_call.1} parent=0
    _
  %s10 = ssub.s32 1, %s8
  %s11 = scalar_select 0, %s10, %s8
  %s12 = sshll.u32 %s0, 4
  %s13 = int_to_ptr.vmem [resolvable:$true] %s12
  %15 = dma.vmem_to_smem %s13, 32, [#allocation7], [#allocation6]
  %s16 = sshll.u32 %s1, 4
  %s17 = int_to_ptr.vmem [resolvable:$true] %s16
  %19 = dma.vmem_to_smem %s17, 32, [#allocation8], [#allocation6]
  %20 = dma.done [#allocation6], 64
  %21 = sfence
  $region1: #{tpu_custom_call.1} parent=0
    #allocation9 [shape = 'u8[8192]{0}', space=vmem, size = 0x2000, scoped, tag = 'output window, operand 0']
    #allocation10 [shape = 's32[2]{0}', space=sflag, size = 0x8, scoped, tag = 'scoped memory for tpu_custom_call.1']
    %22 = vsyncpa [#allocation10], 0
    %s23 = scalar_lea.sflag [#allocation10], 1
    %24 = vsyncpa %s23, 0
    loop: start=0, step=1, limit=4
    $region2: #{tpu_custom_call.1} parent=1 // loop_pre_header
      _
    $region3: #{tpu_custom_call.1} parent=1 // loop_header
      %s26 = sphi 0, %s30
      %p27 = scmp.ge.s32.totalorder %s26, 4
      %s33 = sphi 0, %s45
      %s34 = sphi 0, %s41
      %s35 = sphi 0, %s33
      %s36 = sphi 0, %s34
      %s37 = sphi 0, %s35
      %s38 = sphi 0, %s36
      %s48 = sphi 0, %s50
      %s51 = sphi 0, %s48
      %s52 = sphi 0, %s51
      %s68 = sphi 0, %s52
      %s72 = sphi 0, %s72
      %s74 = sphi 0, %s72
      %s75 = sphi 0, %s74
      %s89 = sphi 0, %s75
      %s93 = sphi 0, %s93
      %s95 = sphi 0, %s93
      %s96 = sphi 0, %s95
      %s110 = sphi 0, %s96
      %s118 = sphi 0, %s120
      %s121 = sphi 0, %s118
      %s122 = sphi 0, %s121
      %s138 = sphi 0, %s122
    $region4: #{tpu_custom_call.1} parent=1 // loop_header_branch
      %29 = sbr.rel (%p27) target = $region8
    $region5: #{tpu_custom_call.1} parent=1 // loop_body
      %s31 = ssub.s32 %s26, 1
      %s32 = ssub.s32 %s26, 2
      %s39 = sadd.s32 1, %s34
      %p40 = scmp.ge.s32.totalorder %s39, 1
      %s41 = scalar_select %p40, 0, %s39
      %s42 = sadd.s32 1, %s33
      %s43 = scalar_select %p40, %s42, %s33
      %p44 = scmp.ge.s32.totalorder %s43, 2
      %s45 = scalar_select %p44, 0, %s43
      %s46 = ssub.s32 %s34, %s41
      %p47 = scmp.eq.s32.totalorder %s46, 0
      %s49 = sadd.s32 %s48, 1
      %s50 = scalar_select %p47, %s48, %s49
      %p53 = pneg %p47
      %p54 = scmp.eq.s32.totalorder %s26, 1
      %p55 = por %p53, %p54
      %p56 = scmp.ne.s32.totalorder %s48, %s51
      %p57 = scmp.eq.s32.totalorder %s26, 0
      %p58 = por %p56, %p57
      %p59 = scmp.ne.s32.totalorder %s48, %s51
      %p60 = scmp.eq.s32.totalorder %s31, 1
      %p61 = por %p59, %p60
      %p62 = scmp.ne.s32.totalorder %s51, %s52
      %p63 = scmp.eq.s32.totalorder %s31, 0
      %p64 = por %p62, %p63
      %p65 = scmp.ne.s32.totalorder %s51, %s52
      %p66 = scmp.eq.s32.totalorder %s32, 1
      %p67 = por %p65, %p66
      %p69 = scmp.ne.s32.totalorder %s52, %s68
      %p70 = scmp.eq.s32.totalorder %s32, 0
      %p71 = por %p69, %p70
      %s73 = sadd.s32 %s72, 1
      %p76 = scmp.eq.s32.totalorder %s26, 1
      %p77 = scmp.ne.s32.totalorder %s72, %s74
      %p78 = scmp.eq.s32.totalorder %s26, 0
      %p79 = por %p77, %p78
      %p80 = scmp.ne.s32.totalorder %s72, %s74
      %p81 = scmp.eq.s32.totalorder %s31, 1
      %p82 = por %p80, %p81
      %p83 = scmp.ne.s32.totalorder %s74, %s75
      %p84 = scmp.eq.s32.totalorder %s31, 0
      %p85 = por %p83, %p84
      %p86 = scmp.ne.s32.totalorder %s74, %s75
      %p87 = scmp.eq.s32.totalorder %s32, 1
      %p88 = por %p86, %p87
      %p90 = scmp.ne.s32.totalorder %s75, %s89
      %p91 = scmp.eq.s32.totalorder %s32, 0
      %p92 = por %p90, %p91
      %s94 = sadd.s32 %s93, 1
      %p97 = scmp.eq.s32.totalorder %s26, 1
      %p98 = scmp.ne.s32.totalorder %s93, %s95
      %p99 = scmp.eq.s32.totalorder %s26, 0
      %p100 = por %p98, %p99
      %p101 = scmp.ne.s32.totalorder %s93, %s95
      %p102 = scmp.eq.s32.totalorder %s31, 1
      %p103 = por %p101, %p102
      %p104 = scmp.ne.s32.totalorder %s95, %s96
      %p105 = scmp.eq.s32.totalorder %s31, 0
      %p106 = por %p104, %p105
      %p107 = scmp.ne.s32.totalorder %s95, %s96
      %p108 = scmp.eq.s32.totalorder %s32, 1
      %p109 = por %p107, %p108
      %p111 = scmp.ne.s32.totalorder %s96, %s110
      %p112 = scmp.eq.s32.totalorder %s32, 0
      %p113 = por %p111, %p112
      %s114 = ssub.s32 %s33, %s45
      %s115 = ssub.s32 %s34, %s41
      %s116 = sor.u32 %s114, %s115
      %p117 = scmp.eq.s32.totalorder %s116, 0
      %s119 = sadd.s32 %s118, 1
      %s120 = scalar_select %p117, %s118, %s119
      %p123 = pneg %p117
      %p124 = scmp.eq.s32.totalorder %s26, 1
      %p125 = por %p123, %p124
      %p126 = scmp.ne.s32.totalorder %s118, %s121
      %p127 = scmp.eq.s32.totalorder %s26, 0
      %p128 = por %p126, %p127
      %p129 = scmp.ne.s32.totalorder %s118, %s121
      %p130 = scmp.eq.s32.totalorder %s31, 1
      %p131 = por %p129, %p130
      %p132 = scmp.ne.s32.totalorder %s121, %s122
      %p133 = scmp.eq.s32.totalorder %s31, 0
      %p134 = por %p132, %p133
      %p135 = scmp.ne.s32.totalorder %s121, %s122
      %p136 = scmp.eq.s32.totalorder %s32, 1
      %p137 = por %p135, %p136
      %p139 = scmp.ne.s32.totalorder %s122, %s138
      %p140 = scmp.eq.s32.totalorder %s32, 0
      %p141 = por %p139, %p140
      %p142 = scmp.le.s32.totalorder 1, %s26
      %p143 = scmp.lt.s32.totalorder %s26, 3
      %p144 = pnand %p142, %p143
      %p145 = pneg %p144
      // Predicated region
      $region9: #{tpu_custom_call.1} parent=5 // pred_check
        _
      $region10: #{tpu_custom_call.1} parent=5 // pred_check_branch
        %147 = sbr.rel (%p144) target = $region12
      $region11: #{tpu_custom_call.1} parent=5 // pred_region
        %s148 = ssub.s32 %s26, 1
        // Predicated region
        $region13: #{tpu_custom_call.1} parent=11 // pred_check
          %p149 = pneg %p64
        $region14: #{tpu_custom_call.1} parent=11 // pred_check_branch
          %151 = sbr.rel (%p149) target = $region16
        $region15: #{tpu_custom_call.1} parent=11 // pred_region
          %p152 = scmp.lt.s32.totalorder %s36, 1
          %s153 = scalar_select %p152, %s36, 1
          %s154 = smul.addr %s153, 8
          %s155 = scalar_lea.vmem %s4, %s154
        $region16: #{tpu_custom_call.1} parent=11 // pred_fallthru
          _
        // Predicated region
        $region17: #{tpu_custom_call.1} parent=11 // pred_check
          %p156 = pneg %p85
        $region18: #{tpu_custom_call.1} parent=11 // pred_check_branch
          %158 = sbr.rel (%p156) target = $region20
        $region19: #{tpu_custom_call.1} parent=11 // pred_region
          _
        $region20: #{tpu_custom_call.1} parent=11 // pred_fallthru
          _
        // Predicated region
        $region21: #{tpu_custom_call.1} parent=11 // pred_check
          %p159 = pneg %p106
        $region22: #{tpu_custom_call.1} parent=11 // pred_check_branch
          %161 = sbr.rel (%p159) target = $region24
        $region23: #{tpu_custom_call.1} parent=11 // pred_region
          _
        $region24: #{tpu_custom_call.1} parent=11 // pred_fallthru
          _
      $region12: #{tpu_custom_call.1} parent=5 // pred_fallthru
        _
      %p162 = scmp.lt.s32.totalorder %s26, 2
      // Predicated region
      $region25: #{tpu_custom_call.1} parent=5 // pred_check
        %p163 = pneg %p162
      $region26: #{tpu_custom_call.1} parent=5 // pred_check_branch
        %165 = sbr.rel (%p163) target = $region28
      $region27: #{tpu_custom_call.1} parent=5 // pred_region
        _
      $region28: #{tpu_custom_call.1} parent=5 // pred_fallthru
        _
      %p166 = scmp.le.s32.totalorder 1, %s26
      %p167 = scmp.lt.s32.totalorder %s26, 3
      %p168 = pnand %p166, %p167
      %p169 = pneg %p168
      // Predicated region
      $region29: #{tpu_custom_call.1} parent=5 // pred_check
        _
      $region30: #{tpu_custom_call.1} parent=5 // pred_check_branch
        %171 = sbr.rel (%p168) target = $region32
      $region31: #{tpu_custom_call.1} parent=5 // pred_region
        %s172 = ssub.s32 %s26, 1
        %p173 = scmp.lt.s32.totalorder %s36, 1
        %s174 = scalar_select %p173, %s36, 1
        %s175 = smul.addr %s174, 8
        %s176 = scalar_lea.vmem %s4, %s175
        %p177 = pneg %p64
        %p178 = pneg %p61
        %p179 = pneg %p85
        %p180 = pneg %p82
        %p181 = pneg %p106
        %p182 = pneg %p103
        %p183 = pneg %p134
        %p184 = pneg %p131
        %s185 = sand.u32 %s121, 1
        %s186 = scalar_lea.sflag [#allocation10], %s185
        %s187 = sand.u32 %s121, 1
        %s188 = smul.addr %s187, 8
        %s189 = scalar_lea.vmem [#allocation9], %s188
        %p190 = scmp.lt.s32.totalorder %s36, 1
        %s191 = scalar_select %p190, %s36, 1
        %s192 = smul.addr %s191, 8
        %s193 = scalar_lea.vmem %s4, %s192
        %s194 = smul.u32 %s36, 8
        loop: start=0, step=1, limit=8
        $region33: #{tpu_custom_call.1} parent=31 // loop_pre_header
          _
        $region34: #{tpu_custom_call.1} parent=31 // loop_header
          %s196 = sphi 0, %s200
          %p197 = scmp.ge.s32.totalorder %s196, 8
        $region35: #{tpu_custom_call.1} parent=31 // loop_header_branch
          %199 = sbr.rel (%p197) target = $region39
        $region36: #{tpu_custom_call.1} parent=31 // loop_body
          %s201 = sadd.s32 %s194, %s196
          %s202 = sshra.s32 %s201, 7
          %s203 = sand.u32 %s201, 127
          %s204 = sadd.s32 %s202, %s35
          %s205 = smul.u32 %s204, 128
          %s206 = sshra.s32 %s201, 7
          %s207 = sand.u32 %s201, 127
          %s208 = sadd.s32 %s205, %s207
          %s209 = sld [smem:[#allocation7 + %s208]]
          %s210 = sld [smem:[#allocation8 + %s208]]
          %s211 = scalar_lea.vmem %s2, %s209
          %s212 = scalar_lea.vmem [#allocation2], %s196
          %s213 = scalar_lea.sflag [#allocation4], %s196
          %p215 = scmp.lt.u32.totalorder 1, 8
          %p216 = pneg %p215
          // Predicated region
          $region40: #{tpu_custom_call.1} parent=36 // pred_check
            _
          $region41: #{tpu_custom_call.1} parent=36 // pred_check_branch
            %218 = sbr.rel (%p215) target = $region43
          $region42: #{tpu_custom_call.1} parent=36 // pred_region
            %s233 = sand.u32 1, 7
            %p234 = scmp.eq.s32.totalorder %s233, 0
            %p235 = pneg %p234
            // Predicated region
            $region55: #{tpu_custom_call.1} parent=42 // pred_check
              _
            $region56: #{tpu_custom_call.1} parent=42 // pred_check_branch
              %237 = sbr.rel (%p234) target = $region58
            $region57: #{tpu_custom_call.1} parent=42 // pred_region
              %s238 = sand.u32 1, 7
              %s239 = ssub.s32 1, %s238
              %s240 = scalar_lea.vmem %s211, %s239
              %s241 = ssub.s32 1, %s238
              %s242 = scalar_lea.vmem %s212, %s241 [#allocation2]
              %s243 = sshllo.u32 0, %s238
              loop: start=0, step=1, limit=1
              $region59: #{tpu_custom_call.1} parent=57 // loop_pre_header
                _
              $region60: #{tpu_custom_call.1} parent=57 // loop_header
                %s245 = sphi 0, %s249
                %p246 = scmp.ge.s32.totalorder %s245, 1
                %s250 = sphi %s240, %s240
                %s251 = sphi %s242, %s242
              $region61: #{tpu_custom_call.1} parent=57 // loop_header_branch
                %248 = sbr.rel (%p246) target = $region65
              $region62: #{tpu_custom_call.1} parent=57 // loop_body
                %v252 = vld [vmem:[%s250] sm:%s243]
                %253 = vst [vmem:[%s251] sm:%s243] %v252
              $region63: #{tpu_custom_call.1} parent=57 // loop_footer
                %s249 = sadd.s32 1, %s245
              $region64: #{tpu_custom_call.1} parent=57 // loop_footer_branch
                %244 = sbr.rel target = $region60
              $region65: #{tpu_custom_call.1} parent=57 // loop_exit
                _
            $region58: #{tpu_custom_call.1} parent=42 // pred_fallthru
              _
          $region43: #{tpu_custom_call.1} parent=36 // pred_fallthru
            _
          // Predicated region
          $region44: #{tpu_custom_call.1} parent=36 // pred_check
            %p219 = pneg %p215
          $region45: #{tpu_custom_call.1} parent=36 // pred_check_branch
            %221 = sbr.rel (%p219) target = $region47
          $region46: #{tpu_custom_call.1} parent=36 // pred_region
            %s222 = sshllo.u32 0, 1
            loop: start=0, step=1, limit=1
            $region48: #{tpu_custom_call.1} parent=46 // loop_pre_header
              _
            $region49: #{tpu_custom_call.1} parent=46 // loop_header
              %s224 = sphi 0, %s228
              %p225 = scmp.ge.s32.totalorder %s224, 1
              %s229 = sphi %s211, %s211
              %s230 = sphi %s212, %s212
            $region50: #{tpu_custom_call.1} parent=46 // loop_header_branch
              %227 = sbr.rel (%p225) target = $region54
            $region51: #{tpu_custom_call.1} parent=46 // loop_body
              %v231 = vld [vmem:[%s229] sm:%s222]
              %232 = vst [vmem:[%s230] sm:%s222] %v231
            $region52: #{tpu_custom_call.1} parent=46 // loop_footer
              %s228 = sadd.s32 1, %s224
            $region53: #{tpu_custom_call.1} parent=46 // loop_footer_branch
              %223 = sbr.rel target = $region49
            $region54: #{tpu_custom_call.1} parent=46 // loop_exit
              _
          $region47: #{tpu_custom_call.1} parent=36 // pred_fallthru
            _
          // Predicated region
          $region66: #{tpu_custom_call.1} parent=36 // pred_check
            _
          $region67: #{tpu_custom_call.1} parent=36 // pred_check_branch
            %256 = sbr.rel (0) target = $region69
          $region68: #{tpu_custom_call.1} parent=36 // pred_region
            %257 = vsyncadd %s213, 16
          $region69: #{tpu_custom_call.1} parent=36 // pred_fallthru
            _
          %s258 = scalar_lea.vmem %s3, %s210
          %s259 = scalar_lea.vmem [#allocation3], %s196
          %s260 = scalar_lea.sflag [#allocation5], %s196
          %p262 = scmp.lt.u32.totalorder 1, 8
          %p263 = pneg %p262
          // Predicated region
          $region70: #{tpu_custom_call.1} parent=36 // pred_check
            _
          $region71: #{tpu_custom_call.1} parent=36 // pred_check_branch
            %265 = sbr.rel (%p262) target = $region73
          $region72: #{tpu_custom_call.1} parent=36 // pred_region
            %s280 = sand.u32 1, 7
            %p281 = scmp.eq.s32.totalorder %s280, 0
            %p282 = pneg %p281
            // Predicated region
            $region85: #{tpu_custom_call.1} parent=72 // pred_check
              _
            $region86: #{tpu_custom_call.1} parent=72 // pred_check_branch
              %284 = sbr.rel (%p281) target = $region88
            $region87: #{tpu_custom_call.1} parent=72 // pred_region
              %s285 = sand.u32 1, 7
              %s286 = ssub.s32 1, %s285
              %s287 = scalar_lea.vmem %s258, %s286
              %s288 = ssub.s32 1, %s285
              %s289 = scalar_lea.vmem %s259, %s288 [#allocation3]
              %s290 = sshllo.u32 0, %s285
              loop: start=0, step=1, limit=1
              $region89: #{tpu_custom_call.1} parent=87 // loop_pre_header
                _
              $region90: #{tpu_custom_call.1} parent=87 // loop_header
                %s292 = sphi 0, %s296
                %p293 = scmp.ge.s32.totalorder %s292, 1
                %s297 = sphi %s287, %s287
                %s298 = sphi %s289, %s289
              $region91: #{tpu_custom_call.1} parent=87 // loop_header_branch
                %295 = sbr.rel (%p293) target = $region95
              $region92: #{tpu_custom_call.1} parent=87 // loop_body
                %v299 = vld [vmem:[%s297] sm:%s290]
                %300 = vst [vmem:[%s298] sm:%s290] %v299
              $region93: #{tpu_custom_call.1} parent=87 // loop_footer
                %s296 = sadd.s32 1, %s292
              $region94: #{tpu_custom_call.1} parent=87 // loop_footer_branch
                %291 = sbr.rel target = $region90
              $region95: #{tpu_custom_call.1} parent=87 // loop_exit
                _
            $region88: #{tpu_custom_call.1} parent=72 // pred_fallthru
              _
          $region73: #{tpu_custom_call.1} parent=36 // pred_fallthru
            _
          // Predicated region
          $region74: #{tpu_custom_call.1} parent=36 // pred_check
            %p266 = pneg %p262
          $region75: #{tpu_custom_call.1} parent=36 // pred_check_branch
            %268 = sbr.rel (%p266) target = $region77
          $region76: #{tpu_custom_call.1} parent=36 // pred_region
            %s269 = sshllo.u32 0, 1
            loop: start=0, step=1, limit=1
            $region78: #{tpu_custom_call.1} parent=76 // loop_pre_header
              _
            $region79: #{tpu_custom_call.1} parent=76 // loop_header
              %s271 = sphi 0, %s275
              %p272 = scmp.ge.s32.totalorder %s271, 1
              %s276 = sphi %s258, %s258
              %s277 = sphi %s259, %s259
            $region80: #{tpu_custom_call.1} parent=76 // loop_header_branch
              %274 = sbr.rel (%p272) target = $region84
            $region81: #{tpu_custom_call.1} parent=76 // loop_body
              %v278 = vld [vmem:[%s276] sm:%s269]
              %279 = vst [vmem:[%s277] sm:%s269] %v278
            $region82: #{tpu_custom_call.1} parent=76 // loop_footer
              %s275 = sadd.s32 1, %s271
            $region83: #{tpu_custom_call.1} parent=76 // loop_footer_branch
              %270 = sbr.rel target = $region79
            $region84: #{tpu_custom_call.1} parent=76 // loop_exit
              _
          $region77: #{tpu_custom_call.1} parent=36 // pred_fallthru
            _
          // Predicated region
          $region96: #{tpu_custom_call.1} parent=36 // pred_check
            _
          $region97: #{tpu_custom_call.1} parent=36 // pred_check_branch
            %303 = sbr.rel (0) target = $region99
          $region98: #{tpu_custom_call.1} parent=36 // pred_region
            %304 = vsyncadd %s260, 16
          $region99: #{tpu_custom_call.1} parent=36 // pred_fallthru
            _
        $region37: #{tpu_custom_call.1} parent=31 // loop_footer
          %s200 = sadd.s32 1, %s196
        $region38: #{tpu_custom_call.1} parent=31 // loop_footer_branch
          %195 = sbr.rel target = $region34
        $region39: #{tpu_custom_call.1} parent=31 // loop_exit
          _
        loop: start=0, step=1, limit=8
        $region100: #{tpu_custom_call.1} parent=31 // loop_pre_header
          _
        $region101: #{tpu_custom_call.1} parent=31 // loop_header
          %s306 = sphi 0, %s310
          %p307 = scmp.ge.s32.totalorder %s306, 8
        $region102: #{tpu_custom_call.1} parent=31 // loop_header_branch
          %309 = sbr.rel (%p307) target = $region106
        $region103: #{tpu_custom_call.1} parent=31 // loop_body
          %s311 = scalar_lea.sflag [#allocation4], %s306
          %313 = dma.done %s311, 16
          %s314 = scalar_lea.sflag [#allocation5], %s306
          %316 = dma.done %s314, 16
        $region104: #{tpu_custom_call.1} parent=31 // loop_footer
          %s310 = sadd.s32 1, %s306
        $region105: #{tpu_custom_call.1} parent=31 // loop_footer_branch
          %305 = sbr.rel target = $region101
        $region106: #{tpu_custom_call.1} parent=31 // loop_exit
          _
        %v317 = vld [vmem:[#allocation2] sm:$0xff]
        %v318 = vld [vmem:[#allocation3] sm:$0xff]
        %v319 = vadd.f32 %v317, %v318
        %v320 = vld [vmem:[%s193] sm:$0xff]
        %v321 = vadd.f32 %v319, %v320
        %vm322 = vcmask 261120
        %v323 = vsel %vm322, %v321, 0.0
        %324 = vadd.xlane.f32.xlu0 %v323
        %v325 = vpop.xlane.xlu0 %324
        %v326 = vrcp.pop 32.0
        %v327 = vmul.f32 %v325, %v326
        %v328 = vsub.f32 %v321, %v327
        %v329 = vmul.f32 %v328, %v328
        %v330 = vsel %vm322, %v329, 0.0
        %331 = vadd.xlane.f32.xlu0 %v330
        %v332 = vpop.xlane.xlu0 %331
        %v333 = vmul.f32 %v332, %v326
        %v334 = vadd.f32 %v333, 1e-12
        %v335 = vrsqrt.pop %v334
        %v336 = vmul.f32 %v328, %v335
        %v337 = vld [vmem:[%s5] sm:$0x1]
        %v339 = vlaneseq
        %v340 = vshrl.u32 %v339, 7
        %v341 = vsub.s32 0, %v340
        %v342 = vrot.slane %v337, %v341
        %v344 = vmul.f32 %v342, %v336
        %v345 = vld [vmem:[%s6] sm:$0x1]
        %v347 = vlaneseq
        %v348 = vshrl.u32 %v347, 7
        %v349 = vsub.s32 0, %v348
        %v350 = vrot.slane %v345, %v349
        %v352 = vadd.f32 %v344, %v350
        %353 = vst.msk [vmem:[%s189] sm:$0xff] %vm322, %v352
        %s354 = sand.u32 %s121, 1
        %s355 = scalar_lea.sflag [#allocation10], %s354
        %s356 = sand.u32 %s121, 1
        %s357 = smul.addr %s356, 8
        %s358 = scalar_lea.vmem [#allocation9], %s357
        // Predicated region
        $region107: #{tpu_custom_call.1} parent=31 // pred_check
          %p359 = pneg %p131
        $region108: #{tpu_custom_call.1} parent=31 // pred_check_branch
          %361 = sbr.rel (%p359) target = $region110
        $region109: #{tpu_custom_call.1} parent=31 // pred_region
          %s363 = ssub.s32 128, 128
          %364 = vsyncadd %s355, %s363
          %s365 = sadd.s32 %s36, %s35
          %s366 = smul.addr %s365, 128
          %s367 = scalar_lea.hbm %s7, %s366
          %s369 = sshll.u32 %s358, 4
          %s370 = int_to_ptr.vmem [resolvable:$true] %s369
          %372 = dma.vmem_to_hbm [thread:$0]  %s370, 128, %s367, %s355
        $region110: #{tpu_custom_call.1} parent=31 // pred_fallthru
          _
      $region32: #{tpu_custom_call.1} parent=5 // pred_fallthru
        _
      %p373 = scmp.le.s32.totalorder 2, %s26
      // Predicated region
      $region111: #{tpu_custom_call.1} parent=5 // pred_check
        %p374 = pneg %p373
      $region112: #{tpu_custom_call.1} parent=5 // pred_check_branch
        %376 = sbr.rel (%p374) target = $region114
      $region113: #{tpu_custom_call.1} parent=5 // pred_region
        %s377 = ssub.s32 %s26, 2
        // Predicated region
        $region115: #{tpu_custom_call.1} parent=113 // pred_check
          %p378 = pneg %p137
        $region116: #{tpu_custom_call.1} parent=113 // pred_check_branch
          %380 = sbr.rel (%p378) target = $region118
        $region117: #{tpu_custom_call.1} parent=113 // pred_region
          %s381 = sand.u32 %s122, 1
          %s382 = scalar_lea.sflag [#allocation10], %s381
          %s383 = sand.u32 %s122, 1
          %s384 = smul.addr %s383, 8
          %s385 = scalar_lea.vmem [#allocation9], %s384
          %386 = dma.done %s382, 128
        $region118: #{tpu_custom_call.1} parent=113 // pred_fallthru
          _
      $region114: #{tpu_custom_call.1} parent=5 // pred_fallthru
        _
    $region6: #{tpu_custom_call.1} parent=1 // loop_footer
      %s30 = sadd.s32 1, %s26
    $region7: #{tpu_custom_call.1} parent=1 // loop_footer_branch
      %25 = sbr.rel target = $region3
    $region8: #{tpu_custom_call.1} parent=1 // loop_exit
      _
    %387 = vsyncpa [#allocation10], 1
    %s388 = scalar_lea.sflag [#allocation10], 1
    %389 = vsyncpa %s388, 1
  %390 = vsyncmov [#allocation4]
  %s391 = vpop.sfrf %390
  %p392 = scmp.eq.s32.totalorder %s391, 0
  %p393 = pneg %p392
  %395 = shalt.err (%p393)
  %s396 = scalar_lea.sflag [#allocation4], 1
  %397 = vsyncmov %s396
  %s398 = vpop.sfrf %397
  %p399 = scmp.eq.s32.totalorder %s398, 0
  %p400 = pneg %p399
  %402 = shalt.err (%p400)
  %s403 = scalar_lea.sflag [#allocation4], 2
  %404 = vsyncmov %s403
  %s405 = vpop.sfrf %404
  %p406 = scmp.eq.s32.totalorder %s405, 0
  %p407 = pneg %p406
  %409 = shalt.err (%p407)
  %s410 = scalar_lea.sflag [#allocation4], 3
  %411 = vsyncmov %s410
  %s412 = vpop.sfrf %411
  %p413 = scmp.eq.s32.totalorder %s412, 0
  %p414 = pneg %p413
  %416 = shalt.err (%p414)
  %s417 = scalar_lea.sflag [#allocation4], 4
  %418 = vsyncmov %s417
  %s419 = vpop.sfrf %418
  %p420 = scmp.eq.s32.totalorder %s419, 0
  %p421 = pneg %p420
  %423 = shalt.err (%p421)
  %s424 = scalar_lea.sflag [#allocation4], 5
  %425 = vsyncmov %s424
  %s426 = vpop.sfrf %425
  %p427 = scmp.eq.s32.totalorder %s426, 0
  %p428 = pneg %p427
  %430 = shalt.err (%p428)
  %s431 = scalar_lea.sflag [#allocation4], 6
  %432 = vsyncmov %s431
  %s433 = vpop.sfrf %432
  %p434 = scmp.eq.s32.totalorder %s433, 0
  %p435 = pneg %p434
  %437 = shalt.err (%p435)
  %s438 = scalar_lea.sflag [#allocation4], 7
  %439 = vsyncmov %s438
  %s440 = vpop.sfrf %439
  %p441 = scmp.eq.s32.totalorder %s440, 0
  %p442 = pneg %p441
  %444 = shalt.err (%p442)
  %445 = vsyncmov [#allocation5]
  %s446 = vpop.sfrf %445
  %p447 = scmp.eq.s32.totalorder %s446, 0
  %p448 = pneg %p447
  %450 = shalt.err (%p448)
  %s451 = scalar_lea.sflag [#allocation5], 1
  %452 = vsyncmov %s451
  %s453 = vpop.sfrf %452
  %p454 = scmp.eq.s32.totalorder %s453, 0
  %p455 = pneg %p454
  %457 = shalt.err (%p455)
  %s458 = scalar_lea.sflag [#allocation5], 2
  %459 = vsyncmov %s458
  %s460 = vpop.sfrf %459
  %p461 = scmp.eq.s32.totalorder %s460, 0
  %p462 = pneg %p461
  %464 = shalt.err (%p462)
  %s465 = scalar_lea.sflag [#allocation5], 3
  %466 = vsyncmov %s465
  %s467 = vpop.sfrf %466
  %p468 = scmp.eq.s32.totalorder %s467, 0
  %p469 = pneg %p468
  %471 = shalt.err (%p469)
  %s472 = scalar_lea.sflag [#allocation5], 4
  %473 = vsyncmov %s472
  %s474 = vpop.sfrf %473
  %p475 = scmp.eq.s32.totalorder %s474, 0
  %p476 = pneg %p475
  %478 = shalt.err (%p476)
  %s479 = scalar_lea.sflag [#allocation5], 5
  %480 = vsyncmov %s479
  %s481 = vpop.sfrf %480
  %p482 = scmp.eq.s32.totalorder %s481, 0
  %p483 = pneg %p482
  %485 = shalt.err (%p483)
  %s486 = scalar_lea.sflag [#allocation5], 6
  %487 = vsyncmov %s486
  %s488 = vpop.sfrf %487
  %p489 = scmp.eq.s32.totalorder %s488, 0
  %p490 = pneg %p489
  %492 = shalt.err (%p490)
  %s493 = scalar_lea.sflag [#allocation5], 7
  %494 = vsyncmov %s493
  %s495 = vpop.sfrf %494
  %p496 = scmp.eq.s32.totalorder %s495, 0
  %p497 = pneg %p496
  %499 = shalt.err (%p497)

</llo_original>
